<compile_context>
chip_gen: v7x
topology: tpu7x:2x2x1
jax: 0.10.0
libtpu: 0.0.40
codegen_flags: <defaults>
</compile_context>

<pallas_src>
import math

import jax
import jax.numpy as jnp
import numpy as np
from jax.experimental import pallas as pl
from jax.experimental.pallas import tpu as pltpu

_LANE = 128


def _drop_path_kernel(scale_ref, x_ref, o_ref):
    # scale_ref: (TB, 1) float32 in VMEM; x_ref / o_ref: (TB, TF) tile in VMEM.
    # Broadcast multiply; promotes to f32 (if x is bf16) and casts only the product.
    o_ref[...] = (x_ref[...] * scale_ref[...]).astype(o_ref.dtype)


def _default_block_target_bytes():
    """Generation-aware block size: keep in+out double-buffered (~4x block) well
    inside per-core VMEM. v7x (64 MiB) -> 4 MiB blocks; v5e/v6e (128 MiB) -> 8 MiB."""
    cap = 64 << 20
    try:
        info = pltpu.get_tpu_info()
        cap = int(getattr(info, "vmem_capacity_bytes", cap))
    except Exception:
        pass
    return int(min(8 << 20, max(2 << 20, cap // 16)))


def _choose_tiles(B, F, itemsize, target_bytes):
    """Pick a (tb, tf) block for the flattened (B, F) array.

    Caller guarantees F % 128 == 0 (wrapper pads). tf is a multiple of 128 that
    divides F; tb is a multiple of the dtype-aware sublane quantum dividing B, or
    B itself (the (8,128) block rule). Blocks target ~`target_bytes`, are capped
    at ~2x target, and the grid is kept >= 2 steps whenever the array is larger
    than one block so v7x's second TensorCore is used.
    """
    sublane = 8 * max(1, 4 // max(1, itemsize))  # 8 f32, 16 bf16/f16, 32 int8/fp8
    target_elems = max(_LANE * sublane, target_bytes // itemsize)

    def lane_divisor(limit):
        # Largest multiple-of-128 divisor of F that is <= limit (F % 128 == 0).
        cand = max(_LANE, (min(limit, F) // _LANE) * _LANE)
        while cand > _LANE and F % cand != 0:
            cand -= _LANE
        return cand

    def sublane_divisor(limit):
        # Largest multiple-of-sublane divisor of B that is <= limit (B % sublane == 0).
        cand = max(sublane, (min(limit, B) // sublane) * sublane)
        while cand > sublane and B % cand != 0:
            cand -= sublane
        return cand

    # Feature tile.
    tf = lane_divisor(target_elems) if F > target_elems else F

    # Batch tile (pack multiple samples per step).
    want_tb = max(1, target_elems // tf)
    if B % sublane == 0 and want_tb < B:
        tb = sublane_divisor(want_tb)
    else:
        tb = B  # full extent is always a legal block extent

    # Cap the block at ~2x target so the double-buffered pipeline footprint
    # never collides with the scoped-VMEM budget (esp. v7x's 64 MiB).
    if tb * tf > 2 * target_elems:
        tf = lane_divisor(max(_LANE, (2 * target_elems) // max(tb, 1)))

    # Megacore: guarantee >= 2 grid steps when the array exceeds one block so
    # v7x's second TensorCore gets work (no effect on single-TC v5e/v6e).
    if B * F > target_elems and (B // tb) * (F // tf) < 2:
        if F // tf < 2 and F > _LANE:
            tf = lane_divisor(max(_LANE, tf // 2))
        elif B // tb < 2 and B > 1 and B % sublane == 0 and tb > sublane:
            tb = sublane_divisor(max(sublane, tb // 2))

    return tb, tf


def _drop_path_pallas(x, scale, *, block_target_bytes=None):
    """out = x * scale (per-sample broadcast), computed with a Pallas TPU kernel.

    x: (B, ...) any float dtype; scale: (B, 1) float32.
    """
    if block_target_bytes is None:
        block_target_bytes = _default_block_target_bytes()

    B = x.shape[0]
    F = math.prod(x.shape[1:]) if x.ndim > 1 else 1
    x2 = x.reshape(B, F)

    # Keep the feature axis lane-dense: pad to a multiple of 128 so stores are
    # full-width vst and _choose_tiles can always tile the feature axis.
    F_pad = -(-F // _LANE) * _LANE
    if F_pad != F:
        x2 = jnp.pad(x2, ((0, 0), (0, F_pad - F)))

    itemsize = jnp.dtype(x.dtype).itemsize
    tb, tf = _choose_tiles(B, F_pad, itemsize, block_target_bytes)
    grid = (B // tb, F_pad // tf)

    # in + out, double-buffered ~= 4x block; +35% headroom, floor 16 MiB
    # (>= v5e scoped default), cap 48 MiB (< v7x's 64 MiB per-TC VMEM).
    block_bytes = tb * tf * itemsize
    vmem_limit = int(min(48 << 20, max(16 << 20, int(4 * block_bytes * 1.35))))

    out2 = pl.pallas_call(
        _drop_path_kernel,
        out_shape=jax.ShapeDtypeStruct((B, F_pad), x.dtype),
        grid=grid,
        in_specs=[
            pl.BlockSpec((tb, 1), lambda i, j: (i, 0)),    # per-sample scales
            pl.BlockSpec((tb, tf), lambda i, j: (i, j)),   # x tile
        ],
        out_specs=pl.BlockSpec((tb, tf), lambda i, j: (i, j)),
        input_output_aliases={1: 0},  # donate the activation slab (x2 -> out)
        compiler_params=pltpu.CompilerParams(
            dimension_semantics=("parallel", "parallel"),
            vmem_limit_bytes=vmem_limit,
        ),
    )(scale, x2)

    if F_pad != F:
        out2 = out2[:, :F]
    return out2.reshape(x.shape)


def drop_path(x, drop_prob, training, key, *, block_target_bytes=None):
    """Functional DropPath matching the PyTorch forward semantics."""
    if drop_prob is None or drop_prob == 0.0 or not training:
        return x
    if drop_prob >= 1.0:
        return jnp.zeros_like(x)
    keep_prob = 1.0 - drop_prob
    B = x.shape[0]
    u = jax.random.uniform(key, (B,), dtype=jnp.float32)
    # scale = floor(keep_prob + u) / keep_prob  -> 0 or 1/keep_prob per sample.
    scale = (jnp.floor(keep_prob + u) / keep_prob).reshape(B, 1)
    return _drop_path_pallas(x, scale, block_target_bytes=block_target_bytes)


class DropPath:
    """Mirror of the nn.Module: holds drop_prob; `training` toggles behavior."""

    def __init__(self, drop_prob=None):
        self.drop_prob = drop_prob
        self.training = True

    def __call__(self, x, key):
        return drop_path(x, self.drop_prob, self.training, key)

    def extra_repr(self):
        return f"p={self.drop_prob}"


if __name__ == "__main__":
    root = jax.random.PRNGKey(0)
    k_x, k_mask, k_x2, k_x3 = jax.random.split(root, 4)

    # --- primary demo: transformer token layout (B, N, C) ---
    B, N, C = 2, 8, 32
    x = jax.random.normal(k_x, (B, N, C), dtype=jnp.float32)
    x_np = np.asarray(x)  # snapshot before the (buffer-donating) kernel call

    drop_prob = 0.25
    keep_prob = 1.0 - drop_prob
    module = DropPath(drop_prob)
    module.training = True

    out = jax.block_until_ready(module(x, k_mask))

    # Reference (same uniforms as the wrapper draws internally).
    u_ref = np.asarray(jax.random.uniform(k_mask, (B,), dtype=jnp.float32))
    scale_ref = (np.floor(keep_prob + u_ref) / keep_prob)[:, None, None]
    expected = x_np * scale_ref
    assert out.shape == x.shape and out.dtype == x.dtype
    np.testing.assert_allclose(np.asarray(out), expected, rtol=1e-6, atol=1e-6)

    # --- bf16 path: scale stays f32, only the product is cast ---
    x_bf16 = jnp.asarray(x_np).astype(jnp.bfloat16)
    out_bf16 = jax.block_until_ready(drop_path(x_bf16, drop_prob, True, k_mask))
    expected_bf16 = (jnp.asarray(x_np).astype(jnp.bfloat16).astype(jnp.float32)
                     * jnp.asarray(scale_ref)).astype(jnp.bfloat16)
    assert out_bf16.dtype == jnp.bfloat16
    np.testing.assert_allclose(
        np.asarray(out_bf16, dtype=np.float32),
        np.asarray(expected_bf16, dtype=np.float32),
        rtol=0.0, atol=0.0,
    )

    # --- multi-block tiling check: force a multi-step grid with a tiny budget ---
    B2, N2, C2 = 16, 8, 128
    xb = jax.random.normal(k_x2, (B2, N2, C2), dtype=jnp.float32)
    xb_np = np.asarray(xb)
    u2 = np.asarray(jax.random.uniform(k_mask, (B2,), dtype=jnp.float32))
    scale2 = (np.floor(keep_prob + u2) / keep_prob).reshape(B2, 1)
    out_tiled = jax.block_until_ready(
        _drop_path_pallas(xb, jnp.asarray(scale2), block_target_bytes=2048)
    )
    expected_tiled = xb_np * scale2[:, :, None]
    np.testing.assert_allclose(np.asarray(out_tiled), expected_tiled, rtol=1e-6, atol=1e-6)

    # --- non-128-divisible F and odd B: exercises the lane-padding path ---
    B3, N3, C3 = 3, 7, 25
    xo = jax.random.normal(k_x3, (B3, N3, C3), dtype=jnp.float32)
    xo_np = np.asarray(xo)
    u3 = np.asarray(jax.random.uniform(k_mask, (B3,), dtype=jnp.float32))
    scale3 = (np.floor(keep_prob + u3) / keep_prob).reshape(B3, 1)
    out_odd = jax.block_until_ready(_drop_path_pallas(xo, jnp.asarray(scale3)))
    expected_odd = xo_np * scale3[:, :, None]
    np.testing.assert_allclose(np.asarray(out_odd), expected_odd, rtol=1e-6, atol=1e-6)

    # --- eval / drop_prob=0 paths must be identity ---
    module.training = False
    out_eval = jax.block_until_ready(module(x, k_mask))
    np.testing.assert_allclose(np.asarray(out_eval), x_np)
    out_p0 = jax.block_until_ready(drop_path(x, 0.0, True, k_mask))
    np.testing.assert_allclose(np.asarray(out_p0), x_np)

    # --- drop_prob = 1.0 guard: all samples dropped, no inf/nan ---
    out_p1 = jax.block_until_ready(drop_path(x, 1.0, True, k_mask))
    np.testing.assert_allclose(np.asarray(out_p1), np.zeros_like(x_np))

    print("KERNEL_OK")
</pallas_src>

<mosaic_0001>
module attributes {stable_mosaic.version = 11 : i64} {
  func.func @_drop_path_kernel(%arg0: i32, %arg1: i32, %arg2: memref<2x1xf32, #tpu.memory_space<vmem>>, %arg3: memref<2x256xf32, #tpu.memory_space<vmem>>, %arg4: memref<2x256xf32, #tpu.memory_space<vmem>>) attributes {dimension_semantics = [#tpu.dimension_semantics<parallel>, #tpu.dimension_semantics<parallel>], iteration_bounds = array<i64: 1, 1>, scalar_prefetch = 0 : i64, scratch_operands = 0 : i64, tpu.core_type = #tpu.core_type<tc>, window_params = [{transform_indices = @transform_0, window_bounds = array<i64: 2, 1>}, {transform_indices = @transform_1, window_bounds = array<i64: 2, 256>}, {transform_indices = @transform_2, window_bounds = array<i64: 2, 256>}]} {
    %c0 = arith.constant 0 : index
    %c0_0 = arith.constant 0 : index
    %0 = vector.load %arg3[%c0, %c0_0] : memref<2x256xf32, #tpu.memory_space<vmem>>, vector<2x256xf32>
    %c0_1 = arith.constant 0 : index
    %c0_2 = arith.constant 0 : index
    %1 = vector.load %arg2[%c0_1, %c0_2] : memref<2x1xf32, #tpu.memory_space<vmem>>, vector<2x1xf32>
    %2 = vector.broadcast %1 : vector<2x1xf32> to vector<2x256xf32>
    %3 = arith.mulf %0, %2 : vector<2x256xf32>
    %c0_3 = arith.constant 0 : index
    %c0_4 = arith.constant 0 : index
    %4 = vector.load %arg4[%c0_3, %c0_4] : memref<2x256xf32, #tpu.memory_space<vmem>>, vector<2x256xf32>
    tpu.vector_store %arg4[%c0_3, %c0_4], %3 {strides = array<i32>} : memref<2x256xf32, #tpu.memory_space<vmem>>, vector<2x256xf32>,
    return
  }
  func.func @transform_0(%arg0: i32, %arg1: i32) -> (i32, i32) {
    %c0_i32 = arith.constant 0 : i32
    %c0_i32_0 = arith.constant 0 : i32
    return %arg0, %c0_i32 : i32, i32
  }
  func.func @transform_1(%arg0: i32, %arg1: i32) -> (i32, i32) {
    %c0_i32 = arith.constant 0 : i32
    return %arg0, %arg1 : i32, i32
  }
  func.func @transform_2(%arg0: i32, %arg1: i32) -> (i32, i32) {
    %c0_i32 = arith.constant 0 : i32
    return %arg0, %arg1 : i32, i32
  }
}

</mosaic_0001>

<llo_original>
// kernel: tpu_custom_call.1
$region0: #{tpu_custom_call.1}
  #allocation0 [shape = 'u32[]', space=smem, size = 0x4, offset = 0x4, fixed_abs, tag = 'smem constant byte address 0x4 - core index']
  #allocation1 [shape = 'u32[144,128]{1,0:T(1,128)}', space=vmem, size = 0x12000, scoped, tag = 'internal scratch']
  %s0 = inlined_call_operand.vmem [shape: f32[2,1], index: 0, kind: input, shape index: {}]
  %s1 = inlined_call_operand.hbm [shape: f32[2,256], index: 1, kind: input, shape index: {}, may-alias: {1,2}]
  %s2 = inlined_call_operand.hbm [shape: f32[2,256], index: 2, kind: output, shape index: {}, may-alias: {1,2}]
  %s3 = sld [smem:[#allocation0]]
  $region22: #{tpu_custom_call.1} parent=0
    _
  %s5 = ssub.s32 1, %s3
  %s6 = scalar_select 0, %s5, %s3
  $region1: #{tpu_custom_call.1} parent=0
    #allocation2 [shape = 'u8[2048]{0}', space=vmem, size = 0x800, scoped, tag = 'input window, operand 1, single buffered']
    #allocation3 [shape = 's32[1]{0}', space=sflag, size = 0x4, scoped, tag = 'scoped memory for tpu_custom_call.1']
    #allocation4 [shape = 's32[1]{0}', space=sflag, size = 0x4, scoped, tag = 'scoped memory for tpu_custom_call.1']
    #allocation5 [shape = 'u8[2048]{0}', space=vmem, size = 0x800, scoped, tag = 'output window, operand 0, single buffered']
    %7 = vsyncpa [#allocation3], 0
    %8 = vsyncpa [#allocation4], 0
    // Predicated region
    $region2: #{tpu_custom_call.1} parent=1 // pred_check
      _
    $region3: #{tpu_custom_call.1} parent=1 // pred_check_branch
      %10 = sbr.rel (0) target = $region5
    $region4: #{tpu_custom_call.1} parent=1 // pred_region
      _
    $region5: #{tpu_custom_call.1} parent=1 // pred_fallthru
      _
    // Predicated region
    $region6: #{tpu_custom_call.1} parent=1 // pred_check
      _
    $region7: #{tpu_custom_call.1} parent=1 // pred_check_branch
      %12 = sbr.rel (0) target = $region9
    $region8: #{tpu_custom_call.1} parent=1 // pred_region
      %s14 = ssub.s32 64, 64
      %15 = vsyncadd [#allocation3], %s14
      %s17 = sshll.u32 [#allocation2], 4
      %s18 = int_to_ptr.vmem [resolvable:$true] %s17
      %20 = dma.hbm_to_vmem [thread:$0]  %s1, 64, %s18, [#allocation3]
    $region9: #{tpu_custom_call.1} parent=1 // pred_fallthru
      _
    // Predicated region
    $region10: #{tpu_custom_call.1} parent=1 // pred_check
      _
    $region11: #{tpu_custom_call.1} parent=1 // pred_check_branch
      %22 = sbr.rel (0) target = $region13
    $region12: #{tpu_custom_call.1} parent=1 // pred_region
      %23 = dma.done [#allocation3], 64
    $region13: #{tpu_custom_call.1} parent=1 // pred_fallthru
      _
    %v24 = vld [vmem:[#allocation2] sm:$0xf]
    %v25 = vld [vmem:[%s0] sm:$0x3]
    %27 = vset.pattern.permute.xlu0 0
    %28 = vperm.xlu0 %27, %v25
    %v29 = vpop.permute.xlu0 %28
    %v31 = vunpack.c.l.s4 269488144
    %v32 = vunpack.c.0.s8 %v31
    %v33 = vlaneseq
    %v34 = vshrl.u32 %v33, 7
    %v35 = vsub.s32 %v32, %v34
    %v36 = vrot.slane %v29, %v35
    %v38 = vmul.f32 %v24, %v36
    %39 = vst [vmem:[#allocation5] sm:$0xf] %v38
    // Predicated region
    $region14: #{tpu_custom_call.1} parent=1 // pred_check
      _
    $region15: #{tpu_custom_call.1} parent=1 // pred_check_branch
      %41 = sbr.rel (0) target = $region17
    $region16: #{tpu_custom_call.1} parent=1 // pred_region
      %s43 = ssub.s32 64, 64
      %44 = vsyncadd [#allocation4], %s43
      %s46 = sshll.u32 [#allocation5], 4
      %s47 = int_to_ptr.vmem [resolvable:$true] %s46
      %49 = dma.vmem_to_hbm [thread:$0]  %s47, 64, %s2, [#allocation4]
    $region17: #{tpu_custom_call.1} parent=1 // pred_fallthru
      _
    // Predicated region
    $region18: #{tpu_custom_call.1} parent=1 // pred_check
      _
    $region19: #{tpu_custom_call.1} parent=1 // pred_check_branch
      %51 = sbr.rel (0) target = $region21
    $region20: #{tpu_custom_call.1} parent=1 // pred_region
      %52 = dma.done [#allocation4], 64
    $region21: #{tpu_custom_call.1} parent=1 // pred_fallthru
      _
    %53 = vsyncpa [#allocation3], 1
    %54 = vsyncpa [#allocation4], 1

</llo_original>
